<compile_context>
chip_gen: v7x
topology: tpu7x:2x2x1
jax: 0.10.0
libtpu: 0.0.40
codegen_flags: <defaults>
</compile_context>

<pallas_src>
import functools

import jax
import jax.numpy as jnp
from jax import lax
from jax.experimental import pallas as pl
from jax.experimental.pallas import tpu as pltpu  # noqa: F401  (TPU backend utilities)


# ---------------------------------------------------------------------------
# Pallas kernel: fused weighted cross-entropy
# ---------------------------------------------------------------------------

def _weighted_ce_kernel(logits_ref, tgt_ref, out_ref, *, pos_weight, neutral_weight, batch):
    """logits_ref: (B, C) f32, tgt_ref: (B, 1) i32, out_ref: (1, 1) f32."""
    x = logits_ref[...]                                        # (B, C)
    t = tgt_ref[...]                                           # (B, 1) int32

    # numerically stable log-softmax along classes
    m = jnp.max(x, axis=-1, keepdims=True)                     # (B, 1)
    s = x - m
    lse = jnp.log(jnp.sum(jnp.exp(s), axis=-1, keepdims=True))  # (B, 1)
    log_probs = s - lse                                         # (B, C)

    # per-example CE: pick log_prob at the target class via a one-hot mask
    col = lax.broadcasted_iota(jnp.int32, x.shape, 1)           # (B, C)
    onehot = (col == t).astype(jnp.float32)                     # (B, C)
    ce = -jnp.sum(log_probs * onehot, axis=-1, keepdims=True)   # (B, 1)

    # class weights: {0: 5, 1: 5, 2: 1}
    w = jnp.where(t == 2, neutral_weight, pos_weight).astype(jnp.float32)  # (B, 1)

    # mean over the batch of (ce * w)
    out_ref[...] = jnp.sum(ce * w, axis=0, keepdims=True) * (1.0 / batch)  # (1, 1)


def sa_cross_entropy_loss(sentiment_output, sentiment_target, weight=5.0):
    """Weighted CE loss: mean_i( CE(logits_i, t_i) * (weight if t_i in {0,1} else 1) ).

    sentiment_output: (bsz, sentiment_cnt) float
    sentiment_target: (bsz,) int
    returns: scalar float32
    """
    B, C = sentiment_output.shape
    logits = sentiment_output.astype(jnp.float32)
    targets = sentiment_target.astype(jnp.int32).reshape(B, 1)

    kernel = functools.partial(
        _weighted_ce_kernel,
        pos_weight=float(weight),
        neutral_weight=1.0,
        batch=B,
    )
    out = pl.pallas_call(
        kernel,
        out_shape=jax.ShapeDtypeStruct((1, 1), jnp.float32),
        in_specs=[
            pl.BlockSpec((B, C), lambda: (0, 0)),   # whole-array tile in VMEM
            pl.BlockSpec((B, 1), lambda: (0, 0)),
        ],
        out_specs=pl.BlockSpec((1, 1), lambda: (0, 0)),
    )(logits, targets)
    # TODO(synk): for very large bsz, grid over row blocks with a partial-sum
    # accumulator; at toy batch sizes a single fused tile is optimal.
    return out[0, 0]


# ---------------------------------------------------------------------------
# Pure-JAX reference (for in-script correctness check)
# ---------------------------------------------------------------------------

def sa_cross_entropy_loss_ref(sentiment_output, sentiment_target, weight=5.0):
    logits = sentiment_output.astype(jnp.float32)
    targets = sentiment_target.astype(jnp.int32)
    log_probs = jax.nn.log_softmax(logits, axis=-1)
    ce = -jnp.take_along_axis(log_probs, targets[:, None], axis=-1)[:, 0]
    w = jnp.where(targets == 2, 1.0, float(weight))
    return jnp.mean(ce * w)


# ---------------------------------------------------------------------------
# Driver
# ---------------------------------------------------------------------------

if __name__ == "__main__":
    key = jax.random.PRNGKey(0)

    B, C = 8, 3  # bsz, sentiment_cnt
    sentiment_output = jax.random.normal(key, (B, C), jnp.float32)
    # deterministic targets covering all three classes (0/1 -> weight 5, 2 -> weight 1)
    sentiment_target = jnp.array([0, 1, 2, 0, 1, 2, 2, 0], dtype=jnp.int32)

    loss_fn = jax.jit(sa_cross_entropy_loss)
    loss = jax.block_until_ready(loss_fn(sentiment_output, sentiment_target))

    ref = sa_cross_entropy_loss_ref(sentiment_output, sentiment_target)
    assert loss.shape == ()
    assert bool(jnp.isfinite(loss))
    assert bool(jnp.allclose(loss, ref, rtol=1e-5, atol=1e-5)), (float(loss), float(ref))
    print("KERNEL_OK")
</pallas_src>

<mosaic_0001>
module attributes {stable_mosaic.version = 11 : i64} {
  func.func @_weighted_ce_kernel(%arg0: memref<8x3xf32, #tpu.memory_space<vmem>>, %arg1: memref<8x1xi32, #tpu.memory_space<vmem>>, %arg2: memref<1x1xf32, #tpu.memory_space<vmem>>) attributes {dimension_semantics = [], scalar_prefetch = 0 : i64, scratch_operands = 0 : i64, tpu.core_type = #tpu.core_type<tc>} {
    %c0 = arith.constant 0 : index
    %c0_0 = arith.constant 0 : index
    %0 = vector.load %arg0[%c0, %c0_0] : memref<8x3xf32, #tpu.memory_space<vmem>>, vector<8x3xf32>
    %c0_1 = arith.constant 0 : index
    %c0_2 = arith.constant 0 : index
    %1 = vector.load %arg1[%c0_1, %c0_2] : memref<8x1xi32, #tpu.memory_space<vmem>>, vector<8x1xi32>
    %cst = arith.constant dense<0xFF800000> : vector<8xf32>
    %2 = vector.multi_reduction <maximumf>, %0, %cst [1] : vector<8x3xf32> to vector<8xf32>
    %3 = vector.shape_cast %2 : vector<8xf32> to vector<8x1xf32>
    %4 = vector.broadcast %3 : vector<8x1xf32> to vector<8x3xf32>
    %5 = arith.subf %0, %4 : vector<8x3xf32>
    %6 = math.exp %5 : vector<8x3xf32>
    %cst_3 = arith.constant dense<0.000000e+00> : vector<8xf32>
    %7 = vector.multi_reduction <add>, %6, %cst_3 [1] : vector<8x3xf32> to vector<8xf32>
    %8 = vector.shape_cast %7 : vector<8xf32> to vector<8x1xf32>
    %9 = math.log %8 : vector<8x1xf32>
    %10 = vector.broadcast %9 : vector<8x1xf32> to vector<8x3xf32>
    %11 = arith.subf %5, %10 : vector<8x3xf32>
    %12 = tpu.iota {dimensions = array<i32: 1>} : vector<8x3xi32>
    %13 = vector.broadcast %1 : vector<8x1xi32> to vector<8x3xi32>
    %14 = arith.cmpi eq, %12, %13 : vector<8x3xi32>
    %15 = arith.extui %14 : vector<8x3xi1> to vector<8x3xi32>
    %16 = arith.sitofp %15 : vector<8x3xi32> to vector<8x3xf32>
    %17 = arith.mulf %11, %16 : vector<8x3xf32>
    %cst_4 = arith.constant dense<0.000000e+00> : vector<8xf32>
    %18 = vector.multi_reduction <add>, %17, %cst_4 [1] : vector<8x3xf32> to vector<8xf32>
    %19 = vector.shape_cast %18 : vector<8xf32> to vector<8x1xf32>
    %cst_5 = arith.constant 0.000000e+00 : f32
    %20 = vector.broadcast %cst_5 : f32 to vector<8x1xf32>
    %21 = arith.subf %20, %19 : vector<8x1xf32>
    %c2_i32 = arith.constant 2 : i32
    %22 = vector.broadcast %c2_i32 : i32 to vector<8x1xi32>
    %23 = arith.cmpi eq, %1, %22 : vector<8x1xi32>
    %cst_6 = arith.constant 1.000000e+00 : f32
    %cst_7 = arith.constant 5.000000e+00 : f32
    %24 = vector.broadcast %cst_6 : f32 to vector<8x1xf32>
    %25 = vector.broadcast %cst_7 : f32 to vector<8x1xf32>
    %26 = arith.select %23, %24, %25 : vector<8x1xi1>, vector<8x1xf32>
    %27 = arith.mulf %21, %26 : vector<8x1xf32>
    %cst_8 = arith.constant dense<0.000000e+00> : vector<1xf32>
    %28 = vector.multi_reduction <add>, %27, %cst_8 [0] : vector<8x1xf32> to vector<1xf32>
    %29 = vector.shape_cast %28 : vector<1xf32> to vector<1x1xf32>
    %cst_9 = arith.constant 1.250000e-01 : f32
    %30 = vector.broadcast %cst_9 : f32 to vector<1x1xf32>
    %31 = arith.mulf %29, %30 : vector<1x1xf32>
    %c0_10 = arith.constant 0 : index
    %c0_11 = arith.constant 0 : index
    %32 = vector.load %arg2[%c0_10, %c0_11] : memref<1x1xf32, #tpu.memory_space<vmem>>, vector<1x1xf32>
    tpu.vector_store %arg2[%c0_10, %c0_11], %31 {strides = array<i32>} : memref<1x1xf32, #tpu.memory_space<vmem>>, vector<1x1xf32>,
    return
  }
}

</mosaic_0001>

<llo_original>
// kernel: sa_cross_entropy_loss.1
$region0: #{sa_cross_entropy_loss.1}
  #allocation0 [shape = 'u32[]', space=smem, size = 0x4, offset = 0x4, fixed_abs, tag = 'smem constant byte address 0x4 - core index']
  #allocation1 [shape = 'u32[144,128]{1,0:T(1,128)}', space=vmem, size = 0x12000, scoped, tag = 'internal scratch']
  %s0 = inlined_call_operand.vmem [shape: f32[8,3], index: 0, kind: input, shape index: {}]
  %s1 = inlined_call_operand.vmem [shape: s32[8,1], index: 1, kind: input, shape index: {}]
  %s2 = inlined_call_operand.hbm [shape: f32[1,1], index: 2, kind: output, shape index: {}]
  %s3 = sld [smem:[#allocation0]]
  $region18: #{sa_cross_entropy_loss.1} parent=0
    _
  %s5 = ssub.s32 1, %s3
  %s6 = scalar_select 0, %s5, %s3
  $region1: #{sa_cross_entropy_loss.1} parent=0
    #allocation2 [shape = 'u8[512]{0}', space=vmem, size = 0x400, scoped, tag = 'output window, operand 0, single buffered']
    #allocation3 [shape = 's32[1]{0}', space=sflag, size = 0x4, scoped, tag = 'scoped memory for sa_cross_entropy_loss.1']
    %7 = vsyncpa [#allocation3], 0
    // Predicated region
    $region2: #{sa_cross_entropy_loss.1} parent=1 // pred_check
      _
    $region3: #{sa_cross_entropy_loss.1} parent=1 // pred_check_branch
      %9 = sbr.rel (0) target = $region5
    $region4: #{sa_cross_entropy_loss.1} parent=1 // pred_region
      _
    $region5: #{sa_cross_entropy_loss.1} parent=1 // pred_fallthru
      _
    // Predicated region
    $region6: #{sa_cross_entropy_loss.1} parent=1 // pred_check
      _
    $region7: #{sa_cross_entropy_loss.1} parent=1 // pred_check_branch
      %11 = sbr.rel (0) target = $region9
    $region8: #{sa_cross_entropy_loss.1} parent=1 // pred_region
      _
    $region9: #{sa_cross_entropy_loss.1} parent=1 // pred_fallthru
      _
    %v12 = vld [vmem:[%s0] sm:$0xff]
    %v13 = vld [vmem:[%s1] sm:$0xff]
    %vm14 = vcmask 23552
    %v15 = vsel %vm14, %v12, -inf
    %16 = vmax.xlane.f32.xlu0 %v15
    %v17 = vpop.xlane.xlu0 %16
    %v18 = vsub.f32 %v12, %v17
    %v19 = vmul.f32 %v18, 1.442695
    %v20 = vpow.pop %v19
    %v21 = vsel %vm14, %v20, 0.0
    %22 = vadd.xlane.f32.xlu0 %v21
    %v23 = vpop.xlane.xlu0 %22
    %v24 = vlog2.pop %v23
    %v25 = vmul.f32 %v24, 0.6931472
    %v26 = vsub.f32 %v18, %v25
    %v27 = vlaneseq
    %v28 = vand.u32 %v27, 127
    %29 = vset.pattern.permute.xlu0 0
    %30 = vperm.xlu0 %29, %v13
    %v31 = vpop.permute.xlu0 %30
    %vm32 = vcmp.eq.s32.totalorder %v28, %v31
    %v33 = vsel %vm32, 1, 0
    %v34 = vcvt.s32.f32 %v33
    %v35 = vmul.f32 %v26, %v34
    %v36 = vsel %vm14, %v35, 0.0
    %37 = vadd.xlane.f32.xlu0 %v36
    %v38 = vpop.xlane.xlu0 %37
    %v39 = vsub.f32 0.0, %v38
    %vm40 = vcmp.eq.s32.totalorder %v13, 2
    %v41 = vsel %vm40, 1.0, 5.0
    %v42 = vmul.f32 %v39, %v41
    %vm43 = vcmask 7168
    %v44 = vsel %vm43, %v42, 0.0
    %v45 = vrot.slane %v44, 4
    %v46 = vadd.f32 %v44, %v45
    %v47 = vrot.slane %v46, 2
    %v48 = vadd.f32 %v46, %v47
    %v49 = vrot.slane %v48, 1
    %v50 = vadd.f32 %v48, %v49
    %v51 = vmul.f32 %v50, 0.125
    %vm52 = vcmask 0
    %53 = vst.msk [vmem:[#allocation2] sm:$0x1] %vm52, %v51
    // Predicated region
    $region10: #{sa_cross_entropy_loss.1} parent=1 // pred_check
      _
    $region11: #{sa_cross_entropy_loss.1} parent=1 // pred_check_branch
      %55 = sbr.rel (0) target = $region13
    $region12: #{sa_cross_entropy_loss.1} parent=1 // pred_region
      %s57 = ssub.s32 16, 16
      %58 = vsyncadd [#allocation3], %s57
      %s60 = sshll.u32 [#allocation2], 4
      %s61 = int_to_ptr.vmem [resolvable:$true] %s60
      %63 = dma.vmem_to_hbm [thread:$0]  %s61, 16, %s2, [#allocation3]
    $region13: #{sa_cross_entropy_loss.1} parent=1 // pred_fallthru
      _
    // Predicated region
    $region14: #{sa_cross_entropy_loss.1} parent=1 // pred_check
      _
    $region15: #{sa_cross_entropy_loss.1} parent=1 // pred_check_branch
      %65 = sbr.rel (0) target = $region17
    $region16: #{sa_cross_entropy_loss.1} parent=1 // pred_region
      %66 = dma.done [#allocation3], 16
    $region17: #{sa_cross_entropy_loss.1} parent=1 // pred_fallthru
      _
    %67 = vsyncpa [#allocation3], 1

</llo_original>
